<compile_context>
chip_gen: v7x
topology: tpu7x:2x2x1
jax: 0.10.0
libtpu: 0.0.40
codegen_flags: <defaults>
</compile_context>

<pallas_src>
import functools

import jax
import jax.numpy as jnp
from jax.experimental import pallas as pl
from jax.experimental.pallas import tpu as pltpu


def _multi_soft_target_kernel(s_ref, t_ref, o_ref, *, T, B, M):
    """Single grid step: full (B, C, M) blocks, softmax over the class axis (axis=1)."""
    inv_T = 1.0 / T
    s = s_ref[...].astype(jnp.float32) * inv_T          # (B, C, M)
    t = t_ref[...].astype(jnp.float32) * inv_T          # (B, C, M)

    # Student log_softmax over the class axis.
    s_max = jnp.max(s, axis=1, keepdims=True)           # (B, 1, M)
    s_shift = s - s_max
    s_lse = jnp.log(jnp.sum(jnp.exp(s_shift), axis=1, keepdims=True))
    log_p_s = s_shift - s_lse

    # Teacher log_softmax; p_t recovered via exp (EUP) -- no vector divide.
    t_max = jnp.max(t, axis=1, keepdims=True)
    t_shift = t - t_max
    t_lse = jnp.log(jnp.sum(jnp.exp(t_shift), axis=1, keepdims=True))
    log_p_t = t_shift - t_lse
    p_t = jnp.exp(log_p_t)

    # Sum of per-slice KL(p_t || p_s); the per-slice scale T^2/B and the final
    # 1/M average are identical for every slice, so fold them into one constant.
    total = jnp.sum(p_t * (log_p_t - log_p_s))
    o_ref[0, 0] = total * (T * T / (B * M))


def multi_soft_target(out_s_multi, out_t_multi, T):
    """JAX/Pallas equivalent of MultiSoftTarget.forward(out_s_multi, out_t_multi).

    out_s_multi, out_t_multi: (B, C, M) arrays (same layout as PyTorch; any float dtype).
    Returns a scalar float32 loss.
    """
    B, C, M = out_s_multi.shape
    kernel = functools.partial(
        _multi_soft_target_kernel, T=float(T), B=float(B), M=float(M)
    )

    loss = pl.pallas_call(
        kernel,
        out_shape=jax.ShapeDtypeStruct((1, 1), jnp.float32),
        in_specs=[
            pl.BlockSpec(memory_space=pltpu.MemorySpace.VMEM),
            pl.BlockSpec(memory_space=pltpu.MemorySpace.VMEM),
        ],
        out_specs=pl.BlockSpec(memory_space=pltpu.MemorySpace.SMEM),
    )(out_s_multi, out_t_multi)

    return loss[0, 0]


def _reference(out_s_multi, out_t_multi, T):
    """Pure-JAX reference mirroring the PyTorch forward (weight=None)."""
    B, C, M = out_s_multi.shape
    total = 0.0
    for i in range(M):
        s = out_s_multi[:, :, i].astype(jnp.float32) / T
        t = out_t_multi[:, :, i].astype(jnp.float32) / T
        log_p_s = jax.nn.log_softmax(s, axis=1)
        p_t = jax.nn.softmax(t, axis=1)
        log_p_t = jax.nn.log_softmax(t, axis=1)
        kl = jnp.sum(p_t * (log_p_t - log_p_s)) / B * T * T
        total = total + kl
    return total / M


if __name__ == "__main__":
    key = jax.random.PRNGKey(0)
    k1, k2 = jax.random.split(key)

    B, C, M = 4, 21, 6   # 21 classes (hinted by SelfAttention(21, 21, 21))
    T = 4.0

    out_s_multi = jax.random.normal(k1, (B, C, M), dtype=jnp.float32)
    out_t_multi = jax.random.normal(k2, (B, C, M), dtype=jnp.float32)

    loss = multi_soft_target(out_s_multi, out_t_multi, T)
    loss = jax.block_until_ready(loss)

    ref = _reference(out_s_multi, out_t_multi, T)
    assert jnp.allclose(loss, ref, rtol=1e-5, atol=1e-5), (loss, ref)

    print("KERNEL_OK")
</pallas_src>

<mosaic_0001>
module attributes {stable_mosaic.version = 11 : i64} {
  func.func @_multi_soft_target_kernel(%arg0: memref<4x21x6xf32, #tpu.memory_space<vmem>>, %arg1: memref<4x21x6xf32, #tpu.memory_space<vmem>>, %arg2: memref<1x1xf32, #tpu.memory_space<smem>>) attributes {dimension_semantics = [], scalar_prefetch = 0 : i64, scratch_operands = 0 : i64, tpu.core_type = #tpu.core_type<tc>} {
    %c0 = arith.constant 0 : index
    %c0_0 = arith.constant 0 : index
    %c0_1 = arith.constant 0 : index
    %0 = vector.load %arg0[%c0, %c0_0, %c0_1] : memref<4x21x6xf32, #tpu.memory_space<vmem>>, vector<4x21x6xf32>
    %cst = arith.constant 2.500000e-01 : f32
    %1 = vector.broadcast %cst : f32 to vector<4x21x6xf32>
    %2 = arith.mulf %0, %1 : vector<4x21x6xf32>
    %c0_2 = arith.constant 0 : index
    %c0_3 = arith.constant 0 : index
    %c0_4 = arith.constant 0 : index
    %3 = vector.load %arg1[%c0_2, %c0_3, %c0_4] : memref<4x21x6xf32, #tpu.memory_space<vmem>>, vector<4x21x6xf32>
    %cst_5 = arith.constant 2.500000e-01 : f32
    %4 = vector.broadcast %cst_5 : f32 to vector<4x21x6xf32>
    %5 = arith.mulf %3, %4 : vector<4x21x6xf32>
    %cst_6 = arith.constant dense<0xFF800000> : vector<4x6xf32>
    %6 = vector.multi_reduction <maximumf>, %2, %cst_6 [1] : vector<4x21x6xf32> to vector<4x6xf32>
    %7 = vector.shape_cast %6 : vector<4x6xf32> to vector<4x1x6xf32>
    %8 = vector.broadcast %7 : vector<4x1x6xf32> to vector<4x21x6xf32>
    %9 = arith.subf %2, %8 : vector<4x21x6xf32>
    %10 = math.exp %9 : vector<4x21x6xf32>
    %cst_7 = arith.constant dense<0.000000e+00> : vector<4x6xf32>
    %11 = vector.multi_reduction <add>, %10, %cst_7 [1] : vector<4x21x6xf32> to vector<4x6xf32>
    %12 = vector.shape_cast %11 : vector<4x6xf32> to vector<4x1x6xf32>
    %13 = math.log %12 : vector<4x1x6xf32>
    %14 = vector.broadcast %13 : vector<4x1x6xf32> to vector<4x21x6xf32>
    %15 = arith.subf %9, %14 : vector<4x21x6xf32>
    %cst_8 = arith.constant dense<0xFF800000> : vector<4x6xf32>
    %16 = vector.multi_reduction <maximumf>, %5, %cst_8 [1] : vector<4x21x6xf32> to vector<4x6xf32>
    %17 = vector.shape_cast %16 : vector<4x6xf32> to vector<4x1x6xf32>
    %18 = vector.broadcast %17 : vector<4x1x6xf32> to vector<4x21x6xf32>
    %19 = arith.subf %5, %18 : vector<4x21x6xf32>
    %20 = math.exp %19 : vector<4x21x6xf32>
    %cst_9 = arith.constant dense<0.000000e+00> : vector<4x6xf32>
    %21 = vector.multi_reduction <add>, %20, %cst_9 [1] : vector<4x21x6xf32> to vector<4x6xf32>
    %22 = vector.shape_cast %21 : vector<4x6xf32> to vector<4x1x6xf32>
    %23 = math.log %22 : vector<4x1x6xf32>
    %24 = vector.broadcast %23 : vector<4x1x6xf32> to vector<4x21x6xf32>
    %25 = arith.subf %19, %24 : vector<4x21x6xf32>
    %26 = math.exp %25 : vector<4x21x6xf32>
    %27 = arith.subf %25, %15 : vector<4x21x6xf32>
    %28 = arith.mulf %26, %27 : vector<4x21x6xf32>
    %29 = vector.shape_cast %28 : vector<4x21x6xf32> to vector<1x4x21x6xf32>
    %cst_10 = arith.constant dense<0.000000e+00> : vector<1xf32>
    %30 = vector.multi_reduction <add>, %29, %cst_10 [1, 2, 3] : vector<1x4x21x6xf32> to vector<1xf32>
    %31 = vector.shape_cast %30 : vector<1xf32> to vector<1x1x1x1xf32>
    %32 = vector.extract %31[0, 0, 0, 0] : f32 from vector<1x1x1x1xf32>
    %cst_11 = arith.constant 0.666666686 : f32
    %33 = arith.mulf %32, %cst_11 : f32
    %c0_12 = arith.constant 0 : index
    %c0_13 = arith.constant 0 : index
    %34 = memref.load %arg2[%c0_12, %c0_13] : memref<1x1xf32, #tpu.memory_space<smem>>
    memref.store %33, %arg2[%c0_12, %c0_13] : memref<1x1xf32, #tpu.memory_space<smem>>
    return
  }
}

</mosaic_0001>

<llo_original>
// kernel: tpu_custom_call.1
$region0: #{tpu_custom_call.1}
  #allocation0 [shape = 'u32[]', space=smem, size = 0x4, offset = 0x4, fixed_abs, tag = 'smem constant byte address 0x4 - core index']
  #allocation1 [shape = 'u32[144,128]{1,0:T(1,128)}', space=vmem, size = 0x12000, scoped, tag = 'internal scratch']
  %s0 = inlined_call_operand.vmem [shape: f32[4,21,6], index: 0, kind: input, shape index: {}]
  %s1 = inlined_call_operand.vmem [shape: f32[4,21,6], index: 1, kind: input, shape index: {}]
  %s2 = inlined_call_operand.hbm [shape: f32[1,1], index: 2, kind: output, shape index: {}]
  %s3 = sld [smem:[#allocation0]]
  $region18: #{tpu_custom_call.1} parent=0
    _
  %s5 = ssub.s32 1, %s3
  %s6 = scalar_select 0, %s5, %s3
  $region1: #{tpu_custom_call.1} parent=0
    #allocation2 [shape = 'u8[512]{0}', space=smem, size = 0x200, scoped, tag = 'output window, operand 0, single buffered']
    #allocation3 [shape = 's32[1]{0}', space=sflag, size = 0x4, scoped, tag = 'scoped memory for tpu_custom_call.1']
    %7 = vsyncpa [#allocation3], 0
    // Predicated region
    $region2: #{tpu_custom_call.1} parent=1 // pred_check
      _
    $region3: #{tpu_custom_call.1} parent=1 // pred_check_branch
      %9 = sbr.rel (0) target = $region5
    $region4: #{tpu_custom_call.1} parent=1 // pred_region
      _
    $region5: #{tpu_custom_call.1} parent=1 // pred_fallthru
      _
    // Predicated region
    $region6: #{tpu_custom_call.1} parent=1 // pred_check
      _
    $region7: #{tpu_custom_call.1} parent=1 // pred_check_branch
      %11 = sbr.rel (0) target = $region9
    $region8: #{tpu_custom_call.1} parent=1 // pred_region
      _
    $region9: #{tpu_custom_call.1} parent=1 // pred_fallthru
      _
    %v12 = vld [vmem:[%s0] sm:$0xff]
    %v13 = vld [vmem:[%s0 + $0x8] sm:$0xff]
    %v14 = vld [vmem:[%s0 + $0x10] sm:$0x1f]
    %v15 = vld [vmem:[%s0 + $0x18] sm:$0xff]
    %v16 = vld [vmem:[%s0 + $0x20] sm:$0xff]
    %v17 = vld [vmem:[%s0 + $0x28] sm:$0x1f]
    %v18 = vld [vmem:[%s0 + $0x30] sm:$0xff]
    %v19 = vld [vmem:[%s0 + $0x38] sm:$0xff]
    %v20 = vld [vmem:[%s0 + $0x40] sm:$0x1f]
    %v21 = vld [vmem:[%s0 + $0x48] sm:$0xff]
    %v22 = vld [vmem:[%s0 + $0x50] sm:$0xff]
    %v23 = vld [vmem:[%s0 + $0x58] sm:$0x1f]
    %v24 = vmul.f32 %v12, 0.25
    %v25 = vmul.f32 %v13, 0.25
    %v26 = vmul.f32 %v14, 0.25
    %v27 = vmul.f32 %v15, 0.25
    %v28 = vmul.f32 %v16, 0.25
    %v29 = vmul.f32 %v17, 0.25
    %v30 = vmul.f32 %v18, 0.25
    %v31 = vmul.f32 %v19, 0.25
    %v32 = vmul.f32 %v20, 0.25
    %v33 = vmul.f32 %v21, 0.25
    %v34 = vmul.f32 %v22, 0.25
    %v35 = vmul.f32 %v23, 0.25
    %v36 = vld [vmem:[%s1] sm:$0xff]
    %v37 = vld [vmem:[%s1 + $0x8] sm:$0xff]
    %v38 = vld [vmem:[%s1 + $0x10] sm:$0x1f]
    %v39 = vld [vmem:[%s1 + $0x18] sm:$0xff]
    %v40 = vld [vmem:[%s1 + $0x20] sm:$0xff]
    %v41 = vld [vmem:[%s1 + $0x28] sm:$0x1f]
    %v42 = vld [vmem:[%s1 + $0x30] sm:$0xff]
    %v43 = vld [vmem:[%s1 + $0x38] sm:$0xff]
    %v44 = vld [vmem:[%s1 + $0x40] sm:$0x1f]
    %v45 = vld [vmem:[%s1 + $0x48] sm:$0xff]
    %v46 = vld [vmem:[%s1 + $0x50] sm:$0xff]
    %v47 = vld [vmem:[%s1 + $0x58] sm:$0x1f]
    %v48 = vmul.f32 %v36, 0.25
    %v49 = vmul.f32 %v37, 0.25
    %v50 = vmul.f32 %v38, 0.25
    %v51 = vmul.f32 %v39, 0.25
    %v52 = vmul.f32 %v40, 0.25
    %v53 = vmul.f32 %v41, 0.25
    %v54 = vmul.f32 %v42, 0.25
    %v55 = vmul.f32 %v43, 0.25
    %v56 = vmul.f32 %v44, 0.25
    %v57 = vmul.f32 %v45, 0.25
    %v58 = vmul.f32 %v46, 0.25
    %v59 = vmul.f32 %v47, 0.25
    %vm60 = vcmask 48128
    %v61 = vsel %vm60, %v24, -inf
    %v62 = vsel %vm60, %v25, -inf
    %v63 = vmax.f32 %v61, %v62
    %vm64 = vcmask 45056
    %v65 = vsel %vm64, %v26, -inf
    %v66 = vmax.f32 %v63, %v65
    %v67 = vrot.slane %v66, 4
    %v68 = vmax.f32 %v66, %v67
    %v69 = vrot.slane %v68, 2
    %v70 = vmax.f32 %v68, %v69
    %v71 = vrot.slane %v70, 1
    %v72 = vmax.f32 %v70, %v71
    %v73 = vsel %vm60, %v27, -inf
    %v74 = vsel %vm60, %v28, -inf
    %v75 = vmax.f32 %v73, %v74
    %v76 = vsel %vm64, %v29, -inf
    %v77 = vmax.f32 %v75, %v76
    %v78 = vrot.slane %v77, 4
    %v79 = vmax.f32 %v77, %v78
    %v80 = vrot.slane %v79, 2
    %v81 = vmax.f32 %v79, %v80
    %v82 = vrot.slane %v81, 1
    %v83 = vmax.f32 %v81, %v82
    %v84 = vsel %vm60, %v30, -inf
    %v85 = vsel %vm60, %v31, -inf
    %v86 = vmax.f32 %v84, %v85
    %v87 = vsel %vm64, %v32, -inf
    %v88 = vmax.f32 %v86, %v87
    %v89 = vrot.slane %v88, 4
    %v90 = vmax.f32 %v88, %v89
    %v91 = vrot.slane %v90, 2
    %v92 = vmax.f32 %v90, %v91
    %v93 = vrot.slane %v92, 1
    %v94 = vmax.f32 %v92, %v93
    %v95 = vsel %vm60, %v33, -inf
    %v96 = vsel %vm60, %v34, -inf
    %v97 = vmax.f32 %v95, %v96
    %v98 = vsel %vm64, %v35, -inf
    %v99 = vmax.f32 %v97, %v98
    %v100 = vrot.slane %v99, 4
    %v101 = vmax.f32 %v99, %v100
    %v102 = vrot.slane %v101, 2
    %v103 = vmax.f32 %v101, %v102
    %v104 = vrot.slane %v103, 1
    %v105 = vmax.f32 %v103, %v104
    %v106 = vsub.f32 %v24, %v72
    %v107 = vsub.f32 %v25, %v72
    %v108 = vsub.f32 %v26, %v72
    %v109 = vsub.f32 %v27, %v83
    %v110 = vsub.f32 %v28, %v83
    %v111 = vsub.f32 %v29, %v83
    %v112 = vsub.f32 %v30, %v94
    %v113 = vsub.f32 %v31, %v94
    %v114 = vsub.f32 %v32, %v94
    %v115 = vsub.f32 %v33, %v105
    %v116 = vsub.f32 %v34, %v105
    %v117 = vsub.f32 %v35, %v105
    %v118 = vmul.f32 %v106, 1.442695
    %v119 = vpow.pop %v118
    %v120 = vmul.f32 %v107, 1.442695
    %v121 = vpow.pop %v120
    %v122 = vmul.f32 %v108, 1.442695
    %v123 = vpow.pop %v122
    %v124 = vmul.f32 %v109, 1.442695
    %v125 = vpow.pop %v124
    %v126 = vmul.f32 %v110, 1.442695
    %v127 = vpow.pop %v126
    %v128 = vmul.f32 %v111, 1.442695
    %v129 = vpow.pop %v128
    %v130 = vmul.f32 %v112, 1.442695
    %v131 = vpow.pop %v130
    %v132 = vmul.f32 %v113, 1.442695
    %v133 = vpow.pop %v132
    %v134 = vmul.f32 %v114, 1.442695
    %v135 = vpow.pop %v134
    %v136 = vmul.f32 %v115, 1.442695
    %v137 = vpow.pop %v136
    %v138 = vmul.f32 %v116, 1.442695
    %v139 = vpow.pop %v138
    %v140 = vmul.f32 %v117, 1.442695
    %v141 = vpow.pop %v140
    %v142 = vsel %vm60, %v119, 0.0
    %v143 = vsel %vm60, %v121, 0.0
    %v144 = vadd.f32 %v142, %v143
    %v145 = vsel %vm64, %v123, 0.0
    %v146 = vadd.f32 %v144, %v145
    %v147 = vrot.slane %v146, 4
    %v148 = vadd.f32 %v146, %v147
    %v149 = vrot.slane %v148, 2
    %v150 = vadd.f32 %v148, %v149
    %v151 = vrot.slane %v150, 1
    %v152 = vadd.f32 %v150, %v151
    %v153 = vsel %vm60, %v125, 0.0
    %v154 = vsel %vm60, %v127, 0.0
    %v155 = vadd.f32 %v153, %v154
    %v156 = vsel %vm64, %v129, 0.0
    %v157 = vadd.f32 %v155, %v156
    %v158 = vrot.slane %v157, 4
    %v159 = vadd.f32 %v157, %v158
    %v160 = vrot.slane %v159, 2
    %v161 = vadd.f32 %v159, %v160
    %v162 = vrot.slane %v161, 1
    %v163 = vadd.f32 %v161, %v162
    %v164 = vsel %vm60, %v131, 0.0
    %v165 = vsel %vm60, %v133, 0.0
    %v166 = vadd.f32 %v164, %v165
    %v167 = vsel %vm64, %v135, 0.0
    %v168 = vadd.f32 %v166, %v167
    %v169 = vrot.slane %v168, 4
    %v170 = vadd.f32 %v168, %v169
    %v171 = vrot.slane %v170, 2
    %v172 = vadd.f32 %v170, %v171
    %v173 = vrot.slane %v172, 1
    %v174 = vadd.f32 %v172, %v173
    %v175 = vsel %vm60, %v137, 0.0
    %v176 = vsel %vm60, %v139, 0.0
    %v177 = vadd.f32 %v175, %v176
    %v178 = vsel %vm64, %v141, 0.0
    %v179 = vadd.f32 %v177, %v178
    %v180 = vrot.slane %v179, 4
    %v181 = vadd.f32 %v179, %v180
    %v182 = vrot.slane %v181, 2
    %v183 = vadd.f32 %v181, %v182
    %v184 = vrot.slane %v183, 1
    %v185 = vadd.f32 %v183, %v184
    %v186 = vlog2.pop %v152
    %v187 = vmul.f32 %v186, 0.6931472
    %v188 = vlog2.pop %v163
    %v189 = vmul.f32 %v188, 0.6931472
    %v190 = vlog2.pop %v174
    %v191 = vmul.f32 %v190, 0.6931472
    %v192 = vlog2.pop %v185
    %v193 = vmul.f32 %v192, 0.6931472
    %v194 = vsub.f32 %v106, %v187
    %v195 = vsub.f32 %v107, %v187
    %v196 = vsub.f32 %v108, %v187
    %v197 = vsub.f32 %v109, %v189
    %v198 = vsub.f32 %v110, %v189
    %v199 = vsub.f32 %v111, %v189
    %v200 = vsub.f32 %v112, %v191
    %v201 = vsub.f32 %v113, %v191
    %v202 = vsub.f32 %v114, %v191
    %v203 = vsub.f32 %v115, %v193
    %v204 = vsub.f32 %v116, %v193
    %v205 = vsub.f32 %v117, %v193
    %v206 = vsel %vm60, %v48, -inf
    %v207 = vsel %vm60, %v49, -inf
    %v208 = vmax.f32 %v206, %v207
    %v209 = vsel %vm64, %v50, -inf
    %v210 = vmax.f32 %v208, %v209
    %v211 = vrot.slane %v210, 4
    %v212 = vmax.f32 %v210, %v211
    %v213 = vrot.slane %v212, 2
    %v214 = vmax.f32 %v212, %v213
    %v215 = vrot.slane %v214, 1
    %v216 = vmax.f32 %v214, %v215
    %v217 = vsel %vm60, %v51, -inf
    %v218 = vsel %vm60, %v52, -inf
    %v219 = vmax.f32 %v217, %v218
    %v220 = vsel %vm64, %v53, -inf
    %v221 = vmax.f32 %v219, %v220
    %v222 = vrot.slane %v221, 4
    %v223 = vmax.f32 %v221, %v222
    %v224 = vrot.slane %v223, 2
    %v225 = vmax.f32 %v223, %v224
    %v226 = vrot.slane %v225, 1
    %v227 = vmax.f32 %v225, %v226
    %v228 = vsel %vm60, %v54, -inf
    %v229 = vsel %vm60, %v55, -inf
    %v230 = vmax.f32 %v228, %v229
    %v231 = vsel %vm64, %v56, -inf
    %v232 = vmax.f32 %v230, %v231
    %v233 = vrot.slane %v232, 4
    %v234 = vmax.f32 %v232, %v233
    %v235 = vrot.slane %v234, 2
    %v236 = vmax.f32 %v234, %v235
    %v237 = vrot.slane %v236, 1
    %v238 = vmax.f32 %v236, %v237
    %v239 = vsel %vm60, %v57, -inf
    %v240 = vsel %vm60, %v58, -inf
    %v241 = vmax.f32 %v239, %v240
    %v242 = vsel %vm64, %v59, -inf
    %v243 = vmax.f32 %v241, %v242
    %v244 = vrot.slane %v243, 4
    %v245 = vmax.f32 %v243, %v244
    %v246 = vrot.slane %v245, 2
    %v247 = vmax.f32 %v245, %v246
    %v248 = vrot.slane %v247, 1
    %v249 = vmax.f32 %v247, %v248
    %v250 = vsub.f32 %v48, %v216
    %v251 = vsub.f32 %v49, %v216
    %v252 = vsub.f32 %v50, %v216
    %v253 = vsub.f32 %v51, %v227
    %v254 = vsub.f32 %v52, %v227
    %v255 = vsub.f32 %v53, %v227
    %v256 = vsub.f32 %v54, %v238
    %v257 = vsub.f32 %v55, %v238
    %v258 = vsub.f32 %v56, %v238
    %v259 = vsub.f32 %v57, %v249
    %v260 = vsub.f32 %v58, %v249
    %v261 = vsub.f32 %v59, %v249
    %v262 = vmul.f32 %v250, 1.442695
    %v263 = vpow.pop %v262
    %v264 = vmul.f32 %v251, 1.442695
    %v265 = vpow.pop %v264
    %v266 = vmul.f32 %v252, 1.442695
    %v267 = vpow.pop %v266
    %v268 = vmul.f32 %v253, 1.442695
    %v269 = vpow.pop %v268
    %v270 = vmul.f32 %v254, 1.442695
    %v271 = vpow.pop %v270
    %v272 = vmul.f32 %v255, 1.442695
    %v273 = vpow.pop %v272
    %v274 = vmul.f32 %v256, 1.442695
    %v275 = vpow.pop %v274
    %v276 = vmul.f32 %v257, 1.442695
    %v277 = vpow.pop %v276
    %v278 = vmul.f32 %v258, 1.442695
    %v279 = vpow.pop %v278
    %v280 = vmul.f32 %v259, 1.442695
    %v281 = vpow.pop %v280
    %v282 = vmul.f32 %v260, 1.442695
    %v283 = vpow.pop %v282
    %v284 = vmul.f32 %v261, 1.442695
    %v285 = vpow.pop %v284
    %v286 = vsel %vm60, %v263, 0.0
    %v287 = vsel %vm60, %v265, 0.0
    %v288 = vadd.f32 %v286, %v287
    %v289 = vsel %vm64, %v267, 0.0
    %v290 = vadd.f32 %v288, %v289
    %v291 = vrot.slane %v290, 4
    %v292 = vadd.f32 %v290, %v291
    %v293 = vrot.slane %v292, 2
    %v294 = vadd.f32 %v292, %v293
    %v295 = vrot.slane %v294, 1
    %v296 = vadd.f32 %v294, %v295
    %v297 = vsel %vm60, %v269, 0.0
    %v298 = vsel %vm60, %v271, 0.0
    %v299 = vadd.f32 %v297, %v298
    %v300 = vsel %vm64, %v273, 0.0
    %v301 = vadd.f32 %v299, %v300
    %v302 = vrot.slane %v301, 4
    %v303 = vadd.f32 %v301, %v302
    %v304 = vrot.slane %v303, 2
    %v305 = vadd.f32 %v303, %v304
    %v306 = vrot.slane %v305, 1
    %v307 = vadd.f32 %v305, %v306
    %v308 = vsel %vm60, %v275, 0.0
    %v309 = vsel %vm60, %v277, 0.0
    %v310 = vadd.f32 %v308, %v309
    %v311 = vsel %vm64, %v279, 0.0
    %v312 = vadd.f32 %v310, %v311
    %v313 = vrot.slane %v312, 4
    %v314 = vadd.f32 %v312, %v313
    %v315 = vrot.slane %v314, 2
    %v316 = vadd.f32 %v314, %v315
    %v317 = vrot.slane %v316, 1
    %v318 = vadd.f32 %v316, %v317
    %v319 = vsel %vm60, %v281, 0.0
    %v320 = vsel %vm60, %v283, 0.0
    %v321 = vadd.f32 %v319, %v320
    %v322 = vsel %vm64, %v285, 0.0
    %v323 = vadd.f32 %v321, %v322
    %v324 = vrot.slane %v323, 4
    %v325 = vadd.f32 %v323, %v324
    %v326 = vrot.slane %v325, 2
    %v327 = vadd.f32 %v325, %v326
    %v328 = vrot.slane %v327, 1
    %v329 = vadd.f32 %v327, %v328
    %v330 = vlog2.pop %v296
    %v331 = vmul.f32 %v330, 0.6931472
    %v332 = vlog2.pop %v307
    %v333 = vmul.f32 %v332, 0.6931472
    %v334 = vlog2.pop %v318
    %v335 = vmul.f32 %v334, 0.6931472
    %v336 = vlog2.pop %v329
    %v337 = vmul.f32 %v336, 0.6931472
    %v338 = vsub.f32 %v250, %v331
    %v339 = vsub.f32 %v251, %v331
    %v340 = vsub.f32 %v252, %v331
    %v341 = vsub.f32 %v253, %v333
    %v342 = vsub.f32 %v254, %v333
    %v343 = vsub.f32 %v255, %v333
    %v344 = vsub.f32 %v256, %v335
    %v345 = vsub.f32 %v257, %v335
    %v346 = vsub.f32 %v258, %v335
    %v347 = vsub.f32 %v259, %v337
    %v348 = vsub.f32 %v260, %v337
    %v349 = vsub.f32 %v261, %v337
    %v350 = vmul.f32 %v338, 1.442695
    %v351 = vpow.pop %v350
    %v352 = vmul.f32 %v339, 1.442695
    %v353 = vpow.pop %v352
    %v354 = vmul.f32 %v340, 1.442695
    %v355 = vpow.pop %v354
    %v356 = vmul.f32 %v341, 1.442695
    %v357 = vpow.pop %v356
    %v358 = vmul.f32 %v342, 1.442695
    %v359 = vpow.pop %v358
    %v360 = vmul.f32 %v343, 1.442695
    %v361 = vpow.pop %v360
    %v362 = vmul.f32 %v344, 1.442695
    %v363 = vpow.pop %v362
    %v364 = vmul.f32 %v345, 1.442695
    %v365 = vpow.pop %v364
    %v366 = vmul.f32 %v346, 1.442695
    %v367 = vpow.pop %v366
    %v368 = vmul.f32 %v347, 1.442695
    %v369 = vpow.pop %v368
    %v370 = vmul.f32 %v348, 1.442695
    %v371 = vpow.pop %v370
    %v372 = vmul.f32 %v349, 1.442695
    %v373 = vpow.pop %v372
    %v374 = vsub.f32 %v338, %v194
    %v375 = vsub.f32 %v339, %v195
    %v376 = vsub.f32 %v340, %v196
    %v377 = vsub.f32 %v341, %v197
    %v378 = vsub.f32 %v342, %v198
    %v379 = vsub.f32 %v343, %v199
    %v380 = vsub.f32 %v344, %v200
    %v381 = vsub.f32 %v345, %v201
    %v382 = vsub.f32 %v346, %v202
    %v383 = vsub.f32 %v347, %v203
    %v384 = vsub.f32 %v348, %v204
    %v385 = vsub.f32 %v349, %v205
    %v386 = vmul.f32 %v351, %v374
    %v387 = vmul.f32 %v353, %v375
    %v388 = vmul.f32 %v355, %v376
    %v389 = vmul.f32 %v357, %v377
    %v390 = vmul.f32 %v359, %v378
    %v391 = vmul.f32 %v361, %v379
    %v392 = vmul.f32 %v363, %v380
    %v393 = vmul.f32 %v365, %v381
    %v394 = vmul.f32 %v367, %v382
    %v395 = vmul.f32 %v369, %v383
    %v396 = vmul.f32 %v371, %v384
    %v397 = vmul.f32 %v373, %v385
    %v398 = vsel %vm60, %v386, 0.0
    %v399 = vsel %vm60, %v387, 0.0
    %v400 = vadd.f32 %v398, %v399
    %v401 = vsel %vm64, %v388, 0.0
    %v402 = vadd.f32 %v400, %v401
    %v403 = vsel %vm60, %v389, 0.0
    %v404 = vadd.f32 %v402, %v403
    %v405 = vsel %vm60, %v390, 0.0
    %v406 = vadd.f32 %v404, %v405
    %v407 = vsel %vm64, %v391, 0.0
    %v408 = vadd.f32 %v406, %v407
    %v409 = vsel %vm60, %v392, 0.0
    %v410 = vadd.f32 %v408, %v409
    %v411 = vsel %vm60, %v393, 0.0
    %v412 = vadd.f32 %v410, %v411
    %v413 = vsel %vm64, %v394, 0.0
    %v414 = vadd.f32 %v412, %v413
    %v415 = vsel %vm60, %v395, 0.0
    %v416 = vadd.f32 %v414, %v415
    %v417 = vsel %vm60, %v396, 0.0
    %v418 = vadd.f32 %v416, %v417
    %v419 = vsel %vm64, %v397, 0.0
    %v420 = vadd.f32 %v418, %v419
    %421 = vadd.xlane.f32.xlu0 %v420
    %v422 = vpop.xlane.xlu0 %421
    %v423 = vrot.slane %v422, 4
    %v424 = vadd.f32 %v422, %v423
    %v425 = vrot.slane %v424, 2
    %v426 = vadd.f32 %v424, %v425
    %v427 = vrot.slane %v426, 1
    %v428 = vadd.f32 %v426, %v427
    %s429 = vtos %v428
    %s430 = smul.f32 %s429, 0.6666667
    %s431 = scalar_lea.smem [#allocation2], 0
    %432 = sst [smem:[%s431]] %s430
    // Predicated region
    $region10: #{tpu_custom_call.1} parent=1 // pred_check
      _
    $region11: #{tpu_custom_call.1} parent=1 // pred_check_branch
      %434 = sbr.rel (0) target = $region13
    $region12: #{tpu_custom_call.1} parent=1 // pred_region
      %s436 = ssub.s32 16, 16
      %437 = vsyncadd [#allocation3], %s436
      %440 = dma.smem_to_hbm [#allocation2], 16, %s2, [#allocation3]
    $region13: #{tpu_custom_call.1} parent=1 // pred_fallthru
      _
    // Predicated region
    $region14: #{tpu_custom_call.1} parent=1 // pred_check
      _
    $region15: #{tpu_custom_call.1} parent=1 // pred_check_branch
      %442 = sbr.rel (0) target = $region17
    $region16: #{tpu_custom_call.1} parent=1 // pred_region
      %443 = dma.done [#allocation3], 16
    $region17: #{tpu_custom_call.1} parent=1 // pred_fallthru
      _
    %444 = sfence
    %445 = vsyncpa [#allocation3], 1

</llo_original>
